<compile_context>
chip_gen: v6e
topology: v6e:2x2x1
jax: 0.10.0
libtpu: 0.0.40
codegen_flags: <defaults>
</compile_context>

<pallas_src>
import functools

import jax
import jax.numpy as jnp
from jax.experimental import pallas as pl
from jax.experimental.pallas import tpu as pltpu


def _mlp_film_kernel(x_ref, film_ref,
                     w1_ref, b1_ref,
                     w2_ref, b2_ref,
                     w3_ref, b3_ref,
                     out_ref, *, hidden_width, hidden_nblocks):
    """Whole forward pass for one batch-tile, fully resident in VMEM.

    x_ref / film_ref / w*_ref are bf16 (MXU-native); b*_ref and the output are
    f32.  All matmuls accumulate in f32; FiLM + ReLU run in f32 on the VPU.
    """
    H = hidden_width

    # fc1 + relu
    h = jnp.dot(x_ref[...], w1_ref[...],
                preferred_element_type=jnp.float32) + b1_ref[...]
    h = jnp.maximum(h, 0.0)

    # hidden_nblocks is a small static int -> Python-unrolled (LLO visibility).
    for i in range(hidden_nblocks):
        h = jnp.dot(h.astype(jnp.bfloat16), w2_ref[...],
                    preferred_element_type=jnp.float32) + b2_ref[...]
        start = i * 2 * H           # lane-aligned as long as H % 128 == 0
        gamma = film_ref[:, start:start + H].astype(jnp.float32)
        beta = film_ref[:, start + H:start + 2 * H].astype(jnp.float32)
        h = jnp.maximum(h * gamma + beta, 0.0)

    # fc3 (output padded to a lane-dense width; zero columns are exact).
    out = jnp.dot(h.astype(jnp.bfloat16), w3_ref[...],
                  preferred_element_type=jnp.float32) + b3_ref[...]
    out_ref[...] = out.astype(out_ref.dtype)


def mlp_film_forward(x, film_params, params, *, hidden_width, hidden_nblocks,
                     batch_tile=512):
    """Pallas wrapper.

    params = (w1, b1, w2, b2, w3, b3); weights are (in_features, out_features)
    (transpose of torch Linear.weight), biases are (1, out_features).
    batch_tile: ~512 is a good default on v5e/v6e; use ~256 on v7x (64 MiB VMEM).
    """
    w1, b1, w2, b2, w3, b3 = params
    B, Din = x.shape
    H = hidden_width
    out_size = w3.shape[1]
    film_dim = film_params.shape[1]
    assert film_dim == 2 * H * hidden_nblocks

    # ---- batch tile: multiple of 8 (sublane), clamp to (rounded) batch ------
    tb = max(8, min(int(batch_tile), ((B + 7) // 8) * 8))
    tb = (tb // 8) * 8
    n_tiles = pl.cdiv(B, tb)
    Bp = n_tiles * tb

    # ---- lane-dense output padding ------------------------------------------
    out_pad = max(128, pl.cdiv(out_size, 128) * 128)
    w3p = jnp.zeros((H, out_pad), w3.dtype).at[:, :out_size].set(w3)
    b3p = jnp.zeros((1, out_pad), b3.dtype).at[:, :out_size].set(b3)

    # ---- dtype policy: bf16 at the MXU / for the film_params HBM stream -----
    xp = x.astype(jnp.bfloat16)
    filmp = film_params.astype(jnp.bfloat16)
    if Bp != B:  # zero-pad batch to a tile multiple; padded rows sliced off.
        xp = jnp.pad(xp, ((0, Bp - B), (0, 0)))
        filmp = jnp.pad(filmp, ((0, Bp - B), (0, 0)))
    w1b = w1.astype(jnp.bfloat16)
    w2b = w2.astype(jnp.bfloat16)
    w3b = w3p.astype(jnp.bfloat16)
    b1f = b1.astype(jnp.float32)
    b2f = b2.astype(jnp.float32)
    b3f = b3p.astype(jnp.float32)

    # ---- VMEM budget (double-buffered pipelined operands + resident weights
    #      + live activation), with headroom; capped for v7x's 64 MiB ---------
    bf16_b, f32_b = 2, 4
    pipelined = 2 * tb * (Din + film_dim) * bf16_b + 2 * tb * out_pad * f32_b
    weights = 2 * ((Din * H + H * H + H * out_pad) * bf16_b
                   + (2 * H + out_pad) * f32_b)
    acts = 4 * tb * H * f32_b
    budget = pipelined + weights + acts
    vmem_limit = int(min(max(int(1.5 * budget) + (4 << 20), 32 << 20), 64 << 20))

    kernel = functools.partial(_mlp_film_kernel,
                               hidden_width=hidden_width,
                               hidden_nblocks=hidden_nblocks)

    resident = lambda shape: pl.BlockSpec(shape, lambda i: (0, 0))

    out_padded = pl.pallas_call(
        kernel,
        out_shape=jax.ShapeDtypeStruct((Bp, out_pad), jnp.float32),
        grid_spec=pltpu.PrefetchScalarGridSpec(
            num_scalar_prefetch=0,
            grid=(n_tiles,),
            in_specs=[
                pl.BlockSpec((tb, Din), lambda i: (i, 0)),        # x
                pl.BlockSpec((tb, film_dim), lambda i: (i, 0)),   # film_params
                resident(w1b.shape), resident(b1f.shape),
                resident(w2b.shape), resident(b2f.shape),
                resident(w3b.shape), resident(b3f.shape),
            ],
            out_specs=pl.BlockSpec((tb, out_pad), lambda i: (i, 0)),
        ),
        compiler_params=pltpu.CompilerParams(
            dimension_semantics=("parallel",),
            vmem_limit_bytes=vmem_limit),
    )(xp, filmp, w1b, b1f, w2b, b2f, w3b, b3f)

    return out_padded[:B, :out_size].astype(x.dtype)


def mlp_film_reference(x, film_params, params, *, hidden_width,
                       hidden_nblocks):
    """Pure-JAX f32 reference mirroring the PyTorch forward."""
    w1, b1, w2, b2, w3, b3 = params
    h = jnp.maximum(x @ w1 + b1, 0.0)
    H = hidden_width
    for i in range(hidden_nblocks):
        h = h @ w2 + b2
        start = i * 2 * H
        gamma = film_params[:, start:start + H]
        beta = film_params[:, start + H:start + 2 * H]
        h = jnp.maximum(h * gamma + beta, 0.0)
    return h @ w3 + b3


if __name__ == "__main__":
    # Meta params (analogous to meta_params dict in the PyTorch module).
    input_size = 64
    hidden_width = 128
    hidden_nblocks = 2
    output_size = 1
    batch = 8

    key = jax.random.PRNGKey(0)
    ks = jax.random.split(key, 8)

    # Deterministic synthetic parameters (PyTorch Linear shapes, transposed to
    # (in_features, out_features) so the kernel computes x @ W + b).
    w1 = jax.random.normal(ks[0], (input_size, hidden_width), jnp.float32) * 0.1
    b1 = jax.random.normal(ks[1], (1, hidden_width), jnp.float32) * 0.1
    w2 = jax.random.normal(ks[2], (hidden_width, hidden_width), jnp.float32) * 0.1
    b2 = jax.random.normal(ks[3], (1, hidden_width), jnp.float32) * 0.1
    w3 = jax.random.normal(ks[4], (hidden_width, output_size), jnp.float32) * 0.1
    b3 = jax.random.normal(ks[5], (1, output_size), jnp.float32) * 0.1
    params = (w1, b1, w2, b2, w3, b3)

    x = jax.random.normal(ks[6], (batch, input_size), jnp.float32)
    film_params = jax.random.normal(
        ks[7], (batch, 2 * hidden_width * hidden_nblocks), jnp.float32)

    out = mlp_film_forward(x, film_params, params,
                           hidden_width=hidden_width,
                           hidden_nblocks=hidden_nblocks)
    out = jax.block_until_ready(out)

    ref = mlp_film_reference(x, film_params, params,
                             hidden_width=hidden_width,
                             hidden_nblocks=hidden_nblocks)
    assert out.shape == (batch, output_size)
    # bf16 MXU operands with f32 accumulation -> small relative error vs f32.
    assert jnp.allclose(out, ref, atol=5e-2, rtol=5e-2), "mismatch vs reference"

    print("KERNEL_OK")
</pallas_src>

<mosaic_0001>
module attributes {stable_mosaic.version = 11 : i64} {
  func.func @_mlp_film_kernel(%arg0: i32, %arg1: memref<8x64xbf16, #tpu.memory_space<vmem>>, %arg2: memref<8x512xbf16, #tpu.memory_space<vmem>>, %arg3: memref<64x128xbf16, #tpu.memory_space<vmem>>, %arg4: memref<1x128xf32, #tpu.memory_space<vmem>>, %arg5: memref<128x128xbf16, #tpu.memory_space<vmem>>, %arg6: memref<1x128xf32, #tpu.memory_space<vmem>>, %arg7: memref<128x128xbf16, #tpu.memory_space<vmem>>, %arg8: memref<1x128xf32, #tpu.memory_space<vmem>>, %arg9: memref<8x128xf32, #tpu.memory_space<vmem>>) attributes {dimension_semantics = [#tpu.dimension_semantics<parallel>], iteration_bounds = array<i64: 1>, scalar_prefetch = 0 : i64, scratch_operands = 0 : i64, tpu.core_type = #tpu.core_type<tc>, window_params = [{transform_indices = @transform_0, window_bounds = array<i64: 8, 64>}, {transform_indices = @transform_1, window_bounds = array<i64: 8, 512>}, {pipeline_mode = #tpu.pipeline_mode<synchronous>, transform_indices = @transform_2, window_bounds = array<i64: 64, 128>}, {pipeline_mode = #tpu.pipeline_mode<synchronous>, transform_indices = @transform_3, window_bounds = array<i64: 1, 128>}, {pipeline_mode = #tpu.pipeline_mode<synchronous>, transform_indices = @transform_4, window_bounds = array<i64: 128, 128>}, {pipeline_mode = #tpu.pipeline_mode<synchronous>, transform_indices = @transform_5, window_bounds = array<i64: 1, 128>}, {pipeline_mode = #tpu.pipeline_mode<synchronous>, transform_indices = @transform_6, window_bounds = array<i64: 128, 128>}, {pipeline_mode = #tpu.pipeline_mode<synchronous>, transform_indices = @transform_7, window_bounds = array<i64: 1, 128>}, {transform_indices = @transform_8, window_bounds = array<i64: 8, 128>}]} {
    %c0 = arith.constant 0 : index
    %c0_0 = arith.constant 0 : index
    %0 = vector.load %arg1[%c0, %c0_0] : memref<8x64xbf16, #tpu.memory_space<vmem>>, vector<8x64xbf16>
    %c0_1 = arith.constant 0 : index
    %c0_2 = arith.constant 0 : index
    %1 = vector.load %arg3[%c0_1, %c0_2] : memref<64x128xbf16, #tpu.memory_space<vmem>>, vector<64x128xbf16>
    %cst = arith.constant dense<0.000000e+00> : vector<8x128xf32>
    %2 = tpu.matmul %0, %1, %cst {dimension_numbers = #tpu.dot_dimension_numbers<[1], [0], [0], [1], [0, 0, 1, 1], [], []>} : vector<8x64xbf16>, vector<64x128xbf16>, vector<8x128xf32> -> vector<8x128xf32>
    %c0_3 = arith.constant 0 : index
    %c0_4 = arith.constant 0 : index
    %3 = vector.load %arg4[%c0_3, %c0_4] : memref<1x128xf32, #tpu.memory_space<vmem>>, vector<1x128xf32>
    %4 = vector.broadcast %3 : vector<1x128xf32> to vector<8x128xf32>
    %5 = arith.addf %2, %4 : vector<8x128xf32>
    %cst_5 = arith.constant 0.000000e+00 : f32
    %6 = vector.broadcast %cst_5 : f32 to vector<8x128xf32>
    %7 = arith.maximumf %5, %6 : vector<8x128xf32>
    %8 = arith.truncf %7 : vector<8x128xf32> to vector<8x128xbf16>
    %c0_6 = arith.constant 0 : index
    %c0_7 = arith.constant 0 : index
    %9 = vector.load %arg5[%c0_6, %c0_7] : memref<128x128xbf16, #tpu.memory_space<vmem>>, vector<128x128xbf16>
    %cst_8 = arith.constant dense<0.000000e+00> : vector<8x128xf32>
    %10 = tpu.matmul %8, %9, %cst_8 {dimension_numbers = #tpu.dot_dimension_numbers<[1], [0], [0], [1], [0, 0, 1, 1], [], []>} : vector<8x128xbf16>, vector<128x128xbf16>, vector<8x128xf32> -> vector<8x128xf32>
    %c0_9 = arith.constant 0 : index
    %c0_10 = arith.constant 0 : index
    %11 = vector.load %arg6[%c0_9, %c0_10] : memref<1x128xf32, #tpu.memory_space<vmem>>, vector<1x128xf32>
    %12 = vector.broadcast %11 : vector<1x128xf32> to vector<8x128xf32>
    %13 = arith.addf %10, %12 : vector<8x128xf32>
    %c0_11 = arith.constant 0 : index
    %c0_12 = arith.constant 0 : index
    %14 = vector.load %arg2[%c0_11, %c0_12] : memref<8x512xbf16, #tpu.memory_space<vmem>>, vector<8x128xbf16>
    %15 = arith.extf %14 : vector<8x128xbf16> to vector<8x128xf32>
    %c0_13 = arith.constant 0 : index
    %c128 = arith.constant 128 : index
    %16 = vector.load %arg2[%c0_13, %c128] : memref<8x512xbf16, #tpu.memory_space<vmem>>, vector<8x128xbf16>
    %17 = arith.extf %16 : vector<8x128xbf16> to vector<8x128xf32>
    %18 = arith.mulf %13, %15 : vector<8x128xf32>
    %19 = arith.addf %18, %17 : vector<8x128xf32>
    %cst_14 = arith.constant 0.000000e+00 : f32
    %20 = vector.broadcast %cst_14 : f32 to vector<8x128xf32>
    %21 = arith.maximumf %19, %20 : vector<8x128xf32>
    %22 = arith.truncf %21 : vector<8x128xf32> to vector<8x128xbf16>
    %c0_15 = arith.constant 0 : index
    %c0_16 = arith.constant 0 : index
    %23 = vector.load %arg5[%c0_15, %c0_16] : memref<128x128xbf16, #tpu.memory_space<vmem>>, vector<128x128xbf16>
    %cst_17 = arith.constant dense<0.000000e+00> : vector<8x128xf32>
    %24 = tpu.matmul %22, %23, %cst_17 {dimension_numbers = #tpu.dot_dimension_numbers<[1], [0], [0], [1], [0, 0, 1, 1], [], []>} : vector<8x128xbf16>, vector<128x128xbf16>, vector<8x128xf32> -> vector<8x128xf32>
    %c0_18 = arith.constant 0 : index
    %c0_19 = arith.constant 0 : index
    %25 = vector.load %arg6[%c0_18, %c0_19] : memref<1x128xf32, #tpu.memory_space<vmem>>, vector<1x128xf32>
    %26 = vector.broadcast %25 : vector<1x128xf32> to vector<8x128xf32>
    %27 = arith.addf %24, %26 : vector<8x128xf32>
    %c0_20 = arith.constant 0 : index
    %c256 = arith.constant 256 : index
    %28 = vector.load %arg2[%c0_20, %c256] : memref<8x512xbf16, #tpu.memory_space<vmem>>, vector<8x128xbf16>
    %29 = arith.extf %28 : vector<8x128xbf16> to vector<8x128xf32>
    %c0_21 = arith.constant 0 : index
    %c384 = arith.constant 384 : index
    %30 = vector.load %arg2[%c0_21, %c384] : memref<8x512xbf16, #tpu.memory_space<vmem>>, vector<8x128xbf16>
    %31 = arith.extf %30 : vector<8x128xbf16> to vector<8x128xf32>
    %32 = arith.mulf %27, %29 : vector<8x128xf32>
    %33 = arith.addf %32, %31 : vector<8x128xf32>
    %cst_22 = arith.constant 0.000000e+00 : f32
    %34 = vector.broadcast %cst_22 : f32 to vector<8x128xf32>
    %35 = arith.maximumf %33, %34 : vector<8x128xf32>
    %36 = arith.truncf %35 : vector<8x128xf32> to vector<8x128xbf16>
    %c0_23 = arith.constant 0 : index
    %c0_24 = arith.constant 0 : index
    %37 = vector.load %arg7[%c0_23, %c0_24] : memref<128x128xbf16, #tpu.memory_space<vmem>>, vector<128x128xbf16>
    %cst_25 = arith.constant dense<0.000000e+00> : vector<8x128xf32>
    %38 = tpu.matmul %36, %37, %cst_25 {dimension_numbers = #tpu.dot_dimension_numbers<[1], [0], [0], [1], [0, 0, 1, 1], [], []>} : vector<8x128xbf16>, vector<128x128xbf16>, vector<8x128xf32> -> vector<8x128xf32>
    %c0_26 = arith.constant 0 : index
    %c0_27 = arith.constant 0 : index
    %39 = vector.load %arg8[%c0_26, %c0_27] : memref<1x128xf32, #tpu.memory_space<vmem>>, vector<1x128xf32>
    %40 = vector.broadcast %39 : vector<1x128xf32> to vector<8x128xf32>
    %41 = arith.addf %38, %40 : vector<8x128xf32>
    %c0_28 = arith.constant 0 : index
    %c0_29 = arith.constant 0 : index
    %42 = vector.load %arg9[%c0_28, %c0_29] : memref<8x128xf32, #tpu.memory_space<vmem>>, vector<8x128xf32>
    tpu.vector_store %arg9[%c0_28, %c0_29], %41 {strides = array<i32>} : memref<8x128xf32, #tpu.memory_space<vmem>>, vector<8x128xf32>,
    return
  }
  func.func @transform_0(%arg0: i32) -> (i32, i32) {
    %c0_i32 = arith.constant 0 : i32
    %c0_i32_0 = arith.constant 0 : i32
    return %arg0, %c0_i32 : i32, i32
  }
  func.func @transform_1(%arg0: i32) -> (i32, i32) {
    %c0_i32 = arith.constant 0 : i32
    %c0_i32_0 = arith.constant 0 : i32
    return %arg0, %c0_i32 : i32, i32
  }
  func.func @transform_2(%arg0: i32) -> (i32, i32) {
    %c0_i32 = arith.constant 0 : i32
    %c0_i32_0 = arith.constant 0 : i32
    %c0_i32_1 = arith.constant 0 : i32
    return %c0_i32, %c0_i32_0 : i32, i32
  }
  func.func @transform_3(%arg0: i32) -> (i32, i32) {
    %c0_i32 = arith.constant 0 : i32
    %c0_i32_0 = arith.constant 0 : i32
    %c0_i32_1 = arith.constant 0 : i32
    return %c0_i32, %c0_i32_0 : i32, i32
  }
  func.func @transform_4(%arg0: i32) -> (i32, i32) {
    %c0_i32 = arith.constant 0 : i32
    %c0_i32_0 = arith.constant 0 : i32
    %c0_i32_1 = arith.constant 0 : i32
    return %c0_i32, %c0_i32_0 : i32, i32
  }
  func.func @transform_5(%arg0: i32) -> (i32, i32) {
    %c0_i32 = arith.constant 0 : i32
    %c0_i32_0 = arith.constant 0 : i32
    %c0_i32_1 = arith.constant 0 : i32
    return %c0_i32, %c0_i32_0 : i32, i32
  }
  func.func @transform_6(%arg0: i32) -> (i32, i32) {
    %c0_i32 = arith.constant 0 : i32
    %c0_i32_0 = arith.constant 0 : i32
    %c0_i32_1 = arith.constant 0 : i32
    return %c0_i32, %c0_i32_0 : i32, i32
  }
  func.func @transform_7(%arg0: i32) -> (i32, i32) {
    %c0_i32 = arith.constant 0 : i32
    %c0_i32_0 = arith.constant 0 : i32
    %c0_i32_1 = arith.constant 0 : i32
    return %c0_i32, %c0_i32_0 : i32, i32
  }
  func.func @transform_8(%arg0: i32) -> (i32, i32) {
    %c0_i32 = arith.constant 0 : i32
    %c0_i32_0 = arith.constant 0 : i32
    return %arg0, %c0_i32 : i32, i32
  }
}

</mosaic_0001>

<llo_original>
// kernel: tpu_custom_call.1
$region0: #{tpu_custom_call.1}
  #allocation0 [shape = 'u32[]', space=smem, size = 0x4, offset = 0x4, fixed_abs, tag = 'smem constant byte address 0x4 - core index']
  #allocation1 [shape = 'u32[144,128]{1,0:T(1,128)}', space=vmem, size = 0x12000, scoped, tag = 'internal scratch']
  %s0 = inlined_call_operand.hbm [shape: bf16[8,64], index: 0, kind: input, shape index: {}]
  %s1 = inlined_call_operand.hbm [shape: bf16[8,512], index: 1, kind: input, shape index: {}]
  %s2 = inlined_call_operand.hbm [shape: bf16[64,128], index: 2, kind: input, shape index: {}]
  %s3 = inlined_call_operand.vmem [shape: f32[1,128], index: 3, kind: input, shape index: {}]
  %s4 = inlined_call_operand.hbm [shape: bf16[128,128], index: 4, kind: input, shape index: {}]
  %s5 = inlined_call_operand.vmem [shape: f32[1,128], index: 5, kind: input, shape index: {}]
  %s6 = inlined_call_operand.hbm [shape: bf16[128,128], index: 6, kind: input, shape index: {}]
  %s7 = inlined_call_operand.vmem [shape: f32[1,128], index: 7, kind: input, shape index: {}]
  %s8 = inlined_call_operand.hbm [shape: f32[8,128], index: 8, kind: output, shape index: {}]
  %s9 = sld [smem:[#allocation0]]
  $region62: #{tpu_custom_call.1} parent=0
    _
  %s11 = ssub.s32 1, %s9
  %s12 = scalar_select 0, %s11, %s9
  $region1: #{tpu_custom_call.1} parent=0
    #allocation2 [shape = 'u8[2048]{0}', space=vmem, size = 0x800, scoped, tag = 'input window, operand 0, single buffered']
    #allocation3 [shape = 's32[1]{0}', space=sflag, size = 0x4, scoped, tag = 'scoped memory for tpu_custom_call.1']
    #allocation4 [shape = 's32[1]{0}', space=sflag, size = 0x4, scoped, tag = 'scoped memory for tpu_custom_call.1']
    #allocation5 [shape = 'u8[8192]{0}', space=vmem, size = 0x2000, scoped, tag = 'input window, operand 1, single buffered']
    #allocation6 [shape = 's32[1]{0}', space=sflag, size = 0x4, scoped, tag = 'scoped memory for tpu_custom_call.1']
    #allocation7 [shape = 'u8[16384]{0}', space=vmem, size = 0x4000, scoped, tag = 'input window, operand 2, single buffered']
    #allocation8 [shape = 'u8[32768]{0}', space=vmem, size = 0x8000, scoped, tag = 'input window, operand 4, single buffered']
    #allocation9 [shape = 's32[1]{0}', space=sflag, size = 0x4, scoped, tag = 'scoped memory for tpu_custom_call.1']
    #allocation10 [shape = 'u8[32768]{0}', space=vmem, size = 0x8000, scoped, tag = 'input window, operand 6, single buffered']
    #allocation11 [shape = 'u8[4096]{0}', space=vmem, size = 0x1000, scoped, tag = 'output window, operand 0, single buffered']
    %13 = vsyncpa [#allocation3], 0
    %14 = vsyncpa [#allocation6], 0
    %15 = vsyncpa [#allocation9], 0
    %16 = vsyncpa [#allocation4], 0
    // Predicated region
    $region2: #{tpu_custom_call.1} parent=1 // pred_check
      _
    $region3: #{tpu_custom_call.1} parent=1 // pred_check_branch
      %18 = sbr.rel (0) target = $region5
    $region4: #{tpu_custom_call.1} parent=1 // pred_region
      %s20 = ssub.s32 64, 64
      %21 = vsyncadd [#allocation3], %s20
      %s23 = sshll.u32 [#allocation2], 4
      %s24 = int_to_ptr.vmem [resolvable:$true] %s23
      %26 = dma.hbm_to_vmem [thread:$0]  %s0, 64, %s24, [#allocation3]
    $region5: #{tpu_custom_call.1} parent=1 // pred_fallthru
      _
    // Predicated region
    $region6: #{tpu_custom_call.1} parent=1 // pred_check
      _
    $region7: #{tpu_custom_call.1} parent=1 // pred_check_branch
      %28 = sbr.rel (0) target = $region9
    $region8: #{tpu_custom_call.1} parent=1 // pred_region
      %s30 = ssub.s32 256, 256
      %31 = vsyncadd [#allocation6], %s30
      %s33 = sshll.u32 [#allocation5], 4
      %s34 = int_to_ptr.vmem [resolvable:$true] %s33
      %36 = dma.hbm_to_vmem [thread:$0]  %s1, 256, %s34, [#allocation6]
    $region9: #{tpu_custom_call.1} parent=1 // pred_fallthru
      _
    // Predicated region
    $region10: #{tpu_custom_call.1} parent=1 // pred_check
      _
    $region11: #{tpu_custom_call.1} parent=1 // pred_check_branch
      %38 = sbr.rel (0) target = $region13
    $region12: #{tpu_custom_call.1} parent=1 // pred_region
      %s40 = ssub.s32 512, 512
      %41 = vsyncadd [#allocation6], %s40
      %s42 = sshll.u32 [#allocation7], 4
      %s43 = int_to_ptr.vmem [resolvable:$true] %s42
      %48 = dma.hbm_to_vmem [thread:$0]  %s2, 512, %s43, [#allocation6], 64, 64, 4
    $region13: #{tpu_custom_call.1} parent=1 // pred_fallthru
      _
    // Predicated region
    $region14: #{tpu_custom_call.1} parent=1 // pred_check
      _
    $region15: #{tpu_custom_call.1} parent=1 // pred_check_branch
      %50 = sbr.rel (0) target = $region17
    $region16: #{tpu_custom_call.1} parent=1 // pred_region
      _
    $region17: #{tpu_custom_call.1} parent=1 // pred_fallthru
      _
    // Predicated region
    $region18: #{tpu_custom_call.1} parent=1 // pred_check
      _
    $region19: #{tpu_custom_call.1} parent=1 // pred_check_branch
      %52 = sbr.rel (0) target = $region21
    $region20: #{tpu_custom_call.1} parent=1 // pred_region
      %s54 = ssub.s32 1024, 1024
      %55 = vsyncadd [#allocation9], %s54
      %s56 = sshll.u32 [#allocation8], 4
      %s57 = int_to_ptr.vmem [resolvable:$true] %s56
      %62 = dma.hbm_to_vmem [thread:$0]  %s4, 1024, %s57, [#allocation9], 64, 64, 4
    $region21: #{tpu_custom_call.1} parent=1 // pred_fallthru
      _
    // Predicated region
    $region22: #{tpu_custom_call.1} parent=1 // pred_check
      _
    $region23: #{tpu_custom_call.1} parent=1 // pred_check_branch
      %64 = sbr.rel (0) target = $region25
    $region24: #{tpu_custom_call.1} parent=1 // pred_region
      _
    $region25: #{tpu_custom_call.1} parent=1 // pred_fallthru
      _
    // Predicated region
    $region26: #{tpu_custom_call.1} parent=1 // pred_check
      _
    $region27: #{tpu_custom_call.1} parent=1 // pred_check_branch
      %66 = sbr.rel (0) target = $region29
    $region28: #{tpu_custom_call.1} parent=1 // pred_region
      %s68 = ssub.s32 1024, 1024
      %69 = vsyncadd [#allocation9], %s68
      %s70 = sshll.u32 [#allocation10], 4
      %s71 = int_to_ptr.vmem [resolvable:$true] %s70
      %76 = dma.hbm_to_vmem [thread:$0]  %s6, 1024, %s71, [#allocation9], 64, 64, 4
    $region29: #{tpu_custom_call.1} parent=1 // pred_fallthru
      _
    // Predicated region
    $region30: #{tpu_custom_call.1} parent=1 // pred_check
      _
    $region31: #{tpu_custom_call.1} parent=1 // pred_check_branch
      %78 = sbr.rel (0) target = $region33
    $region32: #{tpu_custom_call.1} parent=1 // pred_region
      _
    $region33: #{tpu_custom_call.1} parent=1 // pred_fallthru
      _
    // Predicated region
    $region34: #{tpu_custom_call.1} parent=1 // pred_check
      _
    $region35: #{tpu_custom_call.1} parent=1 // pred_check_branch
      %80 = sbr.rel (0) target = $region37
    $region36: #{tpu_custom_call.1} parent=1 // pred_region
      %81 = dma.done [#allocation3], 64
    $region37: #{tpu_custom_call.1} parent=1 // pred_fallthru
      _
    // Predicated region
    $region38: #{tpu_custom_call.1} parent=1 // pred_check
      _
    $region39: #{tpu_custom_call.1} parent=1 // pred_check_branch
      %83 = sbr.rel (0) target = $region41
    $region40: #{tpu_custom_call.1} parent=1 // pred_region
      %84 = dma.done [#allocation6], 256
    $region41: #{tpu_custom_call.1} parent=1 // pred_fallthru
      _
    // Predicated region
    $region42: #{tpu_custom_call.1} parent=1 // pred_check
      _
    $region43: #{tpu_custom_call.1} parent=1 // pred_check_branch
      %86 = sbr.rel (0) target = $region45
    $region44: #{tpu_custom_call.1} parent=1 // pred_region
      %87 = dma.done [#allocation6], 512
    $region45: #{tpu_custom_call.1} parent=1 // pred_fallthru
      _
    // Predicated region
    $region46: #{tpu_custom_call.1} parent=1 // pred_check
      _
    $region47: #{tpu_custom_call.1} parent=1 // pred_check_branch
      %89 = sbr.rel (0) target = $region49
    $region48: #{tpu_custom_call.1} parent=1 // pred_region
      %90 = dma.done [#allocation9], 1024
    $region49: #{tpu_custom_call.1} parent=1 // pred_fallthru
      _
    // Predicated region
    $region50: #{tpu_custom_call.1} parent=1 // pred_check
      _
    $region51: #{tpu_custom_call.1} parent=1 // pred_check_branch
      %92 = sbr.rel (0) target = $region53
    $region52: #{tpu_custom_call.1} parent=1 // pred_region
      %93 = dma.done [#allocation9], 1024
    $region53: #{tpu_custom_call.1} parent=1 // pred_fallthru
      _
    %v95 = vld [vmem:[#allocation2] sm:$0xf]
    %v96 = vld [vmem:[#allocation7] sm:$0xf]
    %v97 = vld [vmem:[#allocation7 + $0x4] sm:$0xf]
    %v98 = vld [vmem:[#allocation7 + $0x8] sm:$0xf]
    %v99 = vld [vmem:[#allocation7 + $0xc] sm:$0xf]
    %v100 = vld [vmem:[#allocation7 + $0x10] sm:$0xf]
    %v101 = vld [vmem:[#allocation7 + $0x14] sm:$0xf]
    %v102 = vld [vmem:[#allocation7 + $0x18] sm:$0xf]
    %v103 = vld [vmem:[#allocation7 + $0x1c] sm:$0xf]
    %v104 = vld [vmem:[%s3] sm:$0x1]
    %v106 = vlaneseq
    %v107 = vshrl.u32 %v106, 7
    %v108 = vsub.s32 0, %v107
    %v109 = vrot.slane %v104, %v108
    %v119 = vunpack.c.l.b16 %v96
    %v120 = vunpack.c.l.b16 %v97
    %v121 = vunpack.c.l.b16 %v98
    %v122 = vunpack.c.l.b16 %v99
    %v123 = vunpack.c.l.b16 %v100
    %v124 = vunpack.c.l.b16 %v101
    %v125 = vunpack.c.l.b16 %v102
    %v126 = vunpack.c.l.b16 %v103
    %v127 = vpack.c.b16 %v120, %v119
    %v128 = vpack.c.b16 %v122, %v121
    %v129 = vpack.c.b16 %v124, %v123
    %v130 = vpack.c.b16 %v126, %v125
    %vm135 = vcmask 523264
    %v137 = vsel %vm135, %v95, 0
    %139 = vmatprep.subr.bf16.mxu0 0
    %140 = vmatpush1.bf16.msra.mxu0 0
    %141 = vmatprep.subr.bf16.mxu0 0
    %142 = vmatpush1.bf16.msra.mxu0 0
    %143 = vmatprep.subr.bf16.mxu0 0
    %144 = vmatpush1.bf16.msra.mxu0 0
    %145 = vmatprep.subr.bf16.mxu0 0
    %146 = vmatpush1.bf16.msra.mxu0 0
    %147 = vmatprep.subr.bf16.mxu0 0
    %148 = vmatpush1.bf16.msra.mxu0 %v130
    %149 = vmatprep.subr.bf16.mxu0 0
    %150 = vmatpush1.bf16.msra.mxu0 %v129
    %151 = vmatprep.subr.bf16.mxu0 0
    %152 = vmatpush1.bf16.msra.mxu0 %v128
    %153 = vmatprep.subr.bf16.mxu0 0
    %154 = vmatpush1.bf16.msra.mxu0 %v127
    %155 = vmatprep.subr.bf16.mxu0 0
    %156 = vmatpush2.bf16.msra.mxu0 0
    %157 = vmatprep.subr.bf16.mxu0 0
    %158 = vmatpush2.bf16.msra.mxu0 0
    %159 = vmatprep.subr.bf16.mxu0 0
    %160 = vmatpush2.bf16.msra.mxu0 0
    %161 = vmatprep.subr.bf16.mxu0 0
    %162 = vmatpush2.bf16.msra.mxu0 0
    %163 = vmatprep.subr.bf16.mxu0 0
    %164 = vmatpush2.bf16.msra.mxu0 0
    %165 = vmatprep.subr.bf16.mxu0 0
    %166 = vmatpush2.bf16.msra.mxu0 0
    %167 = vmatprep.subr.bf16.mxu0 0
    %168 = vmatpush2.bf16.msra.mxu0 0
    %169 = vmatprep.subr.bf16.mxu0 0
    %170 = vmatpush2.bf16.msra.mxu0 0
    %171 = vmatprep.mubr.bf16.mxu0 0
    %172 = vmatmul.mubr.bf16.gmra.mxu0 %v137
    %v173 = vpop.f32.mrf.mxu0
    %v174 = vadd.f32 %v109, %v173
    %v175 = vpop.f32.mrf.mxu0
    %v176 = vpop.f32.mrf.mxu0
    %v177 = vpop.f32.mrf.mxu0
    %178 = vdwg.mxu0
    %v179 = vmax.f32 %v174, 0.0
    %v180 = vpack.c.bf16 %v179, %v179
    %v181 = vld [vmem:[#allocation8] sm:$0xf]
    %v182 = vld [vmem:[#allocation8 + $0x4] sm:$0xf]
    %v183 = vld [vmem:[#allocation8 + $0x8] sm:$0xf]
    %v184 = vld [vmem:[#allocation8 + $0xc] sm:$0xf]
    %v185 = vld [vmem:[#allocation8 + $0x10] sm:$0xf]
    %v186 = vld [vmem:[#allocation8 + $0x14] sm:$0xf]
    %v187 = vld [vmem:[#allocation8 + $0x18] sm:$0xf]
    %v188 = vld [vmem:[#allocation8 + $0x1c] sm:$0xf]
    %v189 = vld [vmem:[#allocation8 + $0x20] sm:$0xf]
    %v190 = vld [vmem:[#allocation8 + $0x24] sm:$0xf]
    %v191 = vld [vmem:[#allocation8 + $0x28] sm:$0xf]
    %v192 = vld [vmem:[#allocation8 + $0x2c] sm:$0xf]
    %v193 = vld [vmem:[#allocation8 + $0x30] sm:$0xf]
    %v194 = vld [vmem:[#allocation8 + $0x34] sm:$0xf]
    %v195 = vld [vmem:[#allocation8 + $0x38] sm:$0xf]
    %v196 = vld [vmem:[#allocation8 + $0x3c] sm:$0xf]
    %v197 = vld [vmem:[%s5] sm:$0x1]
    %v199 = vlaneseq
    %v200 = vshrl.u32 %v199, 7
    %v201 = vsub.s32 0, %v200
    %v202 = vrot.slane %v197, %v201
    %v220 = vunpack.c.l.b16 %v181
    %v221 = vunpack.c.l.b16 %v182
    %v222 = vunpack.c.l.b16 %v183
    %v223 = vunpack.c.l.b16 %v184
    %v224 = vunpack.c.l.b16 %v185
    %v225 = vunpack.c.l.b16 %v186
    %v226 = vunpack.c.l.b16 %v187
    %v227 = vunpack.c.l.b16 %v188
    %v228 = vunpack.c.l.b16 %v189
    %v229 = vunpack.c.l.b16 %v190
    %v230 = vunpack.c.l.b16 %v191
    %v231 = vunpack.c.l.b16 %v192
    %v232 = vunpack.c.l.b16 %v193
    %v233 = vunpack.c.l.b16 %v194
    %v234 = vunpack.c.l.b16 %v195
    %v235 = vunpack.c.l.b16 %v196
    %v236 = vpack.c.b16 %v221, %v220
    %v237 = vpack.c.b16 %v223, %v222
    %v238 = vpack.c.b16 %v225, %v224
    %v239 = vpack.c.b16 %v227, %v226
    %v240 = vpack.c.b16 %v229, %v228
    %v241 = vpack.c.b16 %v231, %v230
    %v242 = vpack.c.b16 %v233, %v232
    %v243 = vpack.c.b16 %v235, %v234
    %252 = vmatprep.subr.bf16.mxu0 0
    %253 = vmatpush1.bf16.msra.mxu0 %v243
    %254 = vmatprep.subr.bf16.mxu0 0
    %255 = vmatpush1.bf16.msra.mxu0 %v242
    %256 = vmatprep.subr.bf16.mxu0 0
    %257 = vmatpush1.bf16.msra.mxu0 %v241
    %258 = vmatprep.subr.bf16.mxu0 0
    %259 = vmatpush1.bf16.msra.mxu0 %v240
    %260 = vmatprep.subr.bf16.mxu0 0
    %261 = vmatpush1.bf16.msra.mxu0 %v239
    %262 = vmatprep.subr.bf16.mxu0 0
    %263 = vmatpush1.bf16.msra.mxu0 %v238
    %264 = vmatprep.subr.bf16.mxu0 0
    %265 = vmatpush1.bf16.msra.mxu0 %v237
    %266 = vmatprep.subr.bf16.mxu0 0
    %267 = vmatpush1.bf16.msra.mxu0 %v236
    %268 = vmatprep.subr.bf16.mxu0 0
    %269 = vmatpush2.bf16.msra.mxu0 0
    %270 = vmatprep.subr.bf16.mxu0 0
    %271 = vmatpush2.bf16.msra.mxu0 0
    %272 = vmatprep.subr.bf16.mxu0 0
    %273 = vmatpush2.bf16.msra.mxu0 0
    %274 = vmatprep.subr.bf16.mxu0 0
    %275 = vmatpush2.bf16.msra.mxu0 0
    %276 = vmatprep.subr.bf16.mxu0 0
    %277 = vmatpush2.bf16.msra.mxu0 0
    %278 = vmatprep.subr.bf16.mxu0 0
    %279 = vmatpush2.bf16.msra.mxu0 0
    %280 = vmatprep.subr.bf16.mxu0 0
    %281 = vmatpush2.bf16.msra.mxu0 0
    %282 = vmatprep.subr.bf16.mxu0 0
    %283 = vmatpush2.bf16.msra.mxu0 0
    %284 = vmatprep.mubr.bf16.mxu0 0
    %285 = vmatmul.mubr.bf16.gmra.mxu0 %v180
    %v286 = vpop.f32.mrf.mxu0
    %v287 = vadd.f32 %v202, %v286
    %v288 = vpop.f32.mrf.mxu0
    %v289 = vpop.f32.mrf.mxu0
    %v290 = vpop.f32.mrf.mxu0
    %291 = vdwg.mxu0
    %v292 = vld [vmem:[#allocation5] sm:$0xf]
    %v293 = vunpack.c.l.bf16 %v292
    %v294 = vld [vmem:[#allocation5 + $0x4] sm:$0xf]
    %v295 = vunpack.c.l.bf16 %v294
    %v296 = vmul.f32 %v287, %v293
    %v297 = vadd.f32 %v296, %v295
    %v298 = vmax.f32 %v297, 0.0
    %v299 = vpack.c.bf16 %v298, %v298
    %300 = vmatprep.subr.bf16.mxu0 0
    %301 = vmatpush1.bf16.msra.mxu0 %v243
    %302 = vmatprep.subr.bf16.mxu0 0
    %303 = vmatpush1.bf16.msra.mxu0 %v242
    %304 = vmatprep.subr.bf16.mxu0 0
    %305 = vmatpush1.bf16.msra.mxu0 %v241
    %306 = vmatprep.subr.bf16.mxu0 0
    %307 = vmatpush1.bf16.msra.mxu0 %v240
    %308 = vmatprep.subr.bf16.mxu0 0
    %309 = vmatpush1.bf16.msra.mxu0 %v239
    %310 = vmatprep.subr.bf16.mxu0 0
    %311 = vmatpush1.bf16.msra.mxu0 %v238
    %312 = vmatprep.subr.bf16.mxu0 0
    %313 = vmatpush1.bf16.msra.mxu0 %v237
    %314 = vmatprep.subr.bf16.mxu0 0
    %315 = vmatpush1.bf16.msra.mxu0 %v236
    %316 = vmatprep.subr.bf16.mxu0 0
    %317 = vmatpush2.bf16.msra.mxu0 0
    %318 = vmatprep.subr.bf16.mxu0 0
    %319 = vmatpush2.bf16.msra.mxu0 0
    %320 = vmatprep.subr.bf16.mxu0 0
    %321 = vmatpush2.bf16.msra.mxu0 0
    %322 = vmatprep.subr.bf16.mxu0 0
    %323 = vmatpush2.bf16.msra.mxu0 0
    %324 = vmatprep.subr.bf16.mxu0 0
    %325 = vmatpush2.bf16.msra.mxu0 0
    %326 = vmatprep.subr.bf16.mxu0 0
    %327 = vmatpush2.bf16.msra.mxu0 0
    %328 = vmatprep.subr.bf16.mxu0 0
    %329 = vmatpush2.bf16.msra.mxu0 0
    %330 = vmatprep.subr.bf16.mxu0 0
    %331 = vmatpush2.bf16.msra.mxu0 0
    %332 = vmatprep.mubr.bf16.mxu0 0
    %333 = vmatmul.mubr.bf16.gmra.mxu0 %v299
    %v334 = vpop.f32.mrf.mxu0
    %v335 = vadd.f32 %v202, %v334
    %v336 = vpop.f32.mrf.mxu0
    %v337 = vpop.f32.mrf.mxu0
    %v338 = vpop.f32.mrf.mxu0
    %339 = vdwg.mxu0
    %v340 = vld [vmem:[#allocation5 + $0x8] sm:$0xf]
    %v341 = vunpack.c.l.bf16 %v340
    %v342 = vld [vmem:[#allocation5 + $0xc] sm:$0xf]
    %v343 = vunpack.c.l.bf16 %v342
    %v344 = vmul.f32 %v335, %v341
    %v345 = vadd.f32 %v344, %v343
    %v346 = vmax.f32 %v345, 0.0
    %v347 = vpack.c.bf16 %v346, %v346
    %v348 = vld [vmem:[#allocation10] sm:$0xf]
    %v349 = vld [vmem:[#allocation10 + $0x4] sm:$0xf]
    %v350 = vld [vmem:[#allocation10 + $0x8] sm:$0xf]
    %v351 = vld [vmem:[#allocation10 + $0xc] sm:$0xf]
    %v352 = vld [vmem:[#allocation10 + $0x10] sm:$0xf]
    %v353 = vld [vmem:[#allocation10 + $0x14] sm:$0xf]
    %v354 = vld [vmem:[#allocation10 + $0x18] sm:$0xf]
    %v355 = vld [vmem:[#allocation10 + $0x1c] sm:$0xf]
    %v356 = vld [vmem:[#allocation10 + $0x20] sm:$0xf]
    %v357 = vld [vmem:[#allocation10 + $0x24] sm:$0xf]
    %v358 = vld [vmem:[#allocation10 + $0x28] sm:$0xf]
    %v359 = vld [vmem:[#allocation10 + $0x2c] sm:$0xf]
    %v360 = vld [vmem:[#allocation10 + $0x30] sm:$0xf]
    %v361 = vld [vmem:[#allocation10 + $0x34] sm:$0xf]
    %v362 = vld [vmem:[#allocation10 + $0x38] sm:$0xf]
    %v363 = vld [vmem:[#allocation10 + $0x3c] sm:$0xf]
    %v364 = vld [vmem:[%s7] sm:$0x1]
    %v366 = vlaneseq
    %v367 = vshrl.u32 %v366, 7
    %v368 = vsub.s32 0, %v367
    %v369 = vrot.slane %v364, %v368
    %v387 = vunpack.c.l.b16 %v348
    %v388 = vunpack.c.l.b16 %v349
    %v389 = vunpack.c.l.b16 %v350
    %v390 = vunpack.c.l.b16 %v351
    %v391 = vunpack.c.l.b16 %v352
    %v392 = vunpack.c.l.b16 %v353
    %v393 = vunpack.c.l.b16 %v354
    %v394 = vunpack.c.l.b16 %v355
    %v395 = vunpack.c.l.b16 %v356
    %v396 = vunpack.c.l.b16 %v357
    %v397 = vunpack.c.l.b16 %v358
    %v398 = vunpack.c.l.b16 %v359
    %v399 = vunpack.c.l.b16 %v360
    %v400 = vunpack.c.l.b16 %v361
    %v401 = vunpack.c.l.b16 %v362
    %v402 = vunpack.c.l.b16 %v363
    %v403 = vpack.c.b16 %v388, %v387
    %v404 = vpack.c.b16 %v390, %v389
    %v405 = vpack.c.b16 %v392, %v391
    %v406 = vpack.c.b16 %v394, %v393
    %v407 = vpack.c.b16 %v396, %v395
    %v408 = vpack.c.b16 %v398, %v397
    %v409 = vpack.c.b16 %v400, %v399
    %v410 = vpack.c.b16 %v402, %v401
    %419 = vmatprep.subr.bf16.mxu0 0
    %420 = vmatpush1.bf16.msra.mxu0 %v410
    %421 = vmatprep.subr.bf16.mxu0 0
    %422 = vmatpush1.bf16.msra.mxu0 %v409
    %423 = vmatprep.subr.bf16.mxu0 0
    %424 = vmatpush1.bf16.msra.mxu0 %v408
    %425 = vmatprep.subr.bf16.mxu0 0
    %426 = vmatpush1.bf16.msra.mxu0 %v407
    %427 = vmatprep.subr.bf16.mxu0 0
    %428 = vmatpush1.bf16.msra.mxu0 %v406
    %429 = vmatprep.subr.bf16.mxu0 0
    %430 = vmatpush1.bf16.msra.mxu0 %v405
    %431 = vmatprep.subr.bf16.mxu0 0
    %432 = vmatpush1.bf16.msra.mxu0 %v404
    %433 = vmatprep.subr.bf16.mxu0 0
    %434 = vmatpush1.bf16.msra.mxu0 %v403
    %435 = vmatprep.subr.bf16.mxu0 0
    %436 = vmatpush2.bf16.msra.mxu0 0
    %437 = vmatprep.subr.bf16.mxu0 0
    %438 = vmatpush2.bf16.msra.mxu0 0
    %439 = vmatprep.subr.bf16.mxu0 0
    %440 = vmatpush2.bf16.msra.mxu0 0
    %441 = vmatprep.subr.bf16.mxu0 0
    %442 = vmatpush2.bf16.msra.mxu0 0
    %443 = vmatprep.subr.bf16.mxu0 0
    %444 = vmatpush2.bf16.msra.mxu0 0
    %445 = vmatprep.subr.bf16.mxu0 0
    %446 = vmatpush2.bf16.msra.mxu0 0
    %447 = vmatprep.subr.bf16.mxu0 0
    %448 = vmatpush2.bf16.msra.mxu0 0
    %449 = vmatprep.subr.bf16.mxu0 0
    %450 = vmatpush2.bf16.msra.mxu0 0
    %451 = vmatprep.mubr.bf16.mxu0 0
    %452 = vmatmul.mubr.bf16.gmra.mxu0 %v347
    %v453 = vpop.f32.mrf.mxu0
    %v454 = vadd.f32 %v369, %v453
    %v455 = vpop.f32.mrf.mxu0
    %v456 = vpop.f32.mrf.mxu0
    %v457 = vpop.f32.mrf.mxu0
    %458 = vdwg.mxu0
    %459 = vst [vmem:[#allocation11] sm:$0xff] %v454
    // Predicated region
    $region54: #{tpu_custom_call.1} parent=1 // pred_check
      _
    $region55: #{tpu_custom_call.1} parent=1 // pred_check_branch
      %461 = sbr.rel (0) target = $region57
    $region56: #{tpu_custom_call.1} parent=1 // pred_region
      %s463 = ssub.s32 128, 128
      %464 = vsyncadd [#allocation4], %s463
      %s466 = sshll.u32 [#allocation11], 4
      %s467 = int_to_ptr.vmem [resolvable:$true] %s466
      %469 = dma.vmem_to_hbm [thread:$0]  %s467, 128, %s8, [#allocation4]
    $region57: #{tpu_custom_call.1} parent=1 // pred_fallthru
      _
    // Predicated region
    $region58: #{tpu_custom_call.1} parent=1 // pred_check
      _
    $region59: #{tpu_custom_call.1} parent=1 // pred_check_branch
      %471 = sbr.rel (0) target = $region61
    $region60: #{tpu_custom_call.1} parent=1 // pred_region
      %472 = dma.done [#allocation4], 128
    $region61: #{tpu_custom_call.1} parent=1 // pred_fallthru
      _
    %473 = vsyncpa [#allocation3], 1
    %474 = vsyncpa [#allocation6], 1
    %475 = vsyncpa [#allocation9], 1
    %476 = vsyncpa [#allocation4], 1

</llo_original>
